<compile_context>
chip_gen: v6e
topology: v6e:2x2x1
jax: 0.10.0
libtpu: 0.0.40
codegen_flags: <defaults>
</compile_context>

<pallas_src>
import functools

import jax
import jax.numpy as jnp
from jax import lax
from jax.experimental import pallas as pl
from jax.experimental.pallas import tpu as pltpu


def _round_up(x, m):
    return ((x + m - 1) // m) * m


def _ce_partial_kernel(preds_ref, targets_ref, out_ref, *, n_rows):
    """Accumulate (sum of per-row CE, #valid rows) for one batch partial.

    preds_ref   : (tn, C) float block in VMEM (native dtype, full class axis).
    targets_ref : (tn, 1) int32 block in VMEM (raw targets, before //4).
    out_ref     : (1, 8, 128) float32 VMEM block, resident across the inner
                  (reduction) grid axis; [0,0,0] = partial loss total,
                  [0,0,1] = partial valid-row count.
    """
    i = pl.program_id(1)

    @pl.when(i == 0)
    def _init():
        out_ref[...] = jnp.zeros_like(out_ref)

    x = preds_ref[...]                                   # (tn, C) native dtype
    tn, c = x.shape

    tgt = targets_ref[...]                               # (tn, 1) int32
    # torch `targets // 4` is floor division; arithmetic >>2 == floor-div by 4.
    new_tgt = jnp.right_shift(tgt, 2)

    # Numerically stable CE with the max term cancelled:
    #   loss = log(sum(exp(x - m))) - (x[target] - m)
    m = jnp.max(x, axis=-1, keepdims=True)               # native dtype
    shifted = (x - m).astype(jnp.float32)                # single f32 temp

    sum_e = jnp.sum(jnp.exp(shifted), axis=-1, keepdims=True)           # (tn, 1)
    class_ids = lax.broadcasted_iota(jnp.int32, (tn, c), 1)
    tgt_shift = jnp.sum(jnp.where(class_ids == new_tgt, shifted, 0.0),
                        axis=-1, keepdims=True)                          # (tn, 1)
    per_row = jnp.log(sum_e) - tgt_shift                 # == logsumexp(x) - x[t]

    # Valid rows: not ignore_index(-1) after //4 and inside the real batch.
    # The ragged tail block may contain garbage (NaN/Inf) -> mask with where.
    block_id = pl.program_id(0) * pl.num_programs(1) + i
    rows = block_id * tn + lax.broadcasted_iota(jnp.int32, (tn, 1), 0)
    valid = jnp.logical_and(new_tgt != -1, rows < n_rows)

    tile_total = jnp.sum(jnp.where(valid, per_row, 0.0))
    tile_count = jnp.sum(valid.astype(jnp.float32))

    sub = lax.broadcasted_iota(jnp.int32, out_ref.shape, 1)
    lane = lax.broadcasted_iota(jnp.int32, out_ref.shape, 2)
    upd = (jnp.where(jnp.logical_and(sub == 0, lane == 0), tile_total, 0.0)
           + jnp.where(jnp.logical_and(sub == 0, lane == 1), tile_count, 0.0))
    out_ref[...] += upd


def custom_cross_entropy_loss(preds, targets, *, num_partials=None,
                              target_tile_bytes=None, max_block_rows=None):
    """Pallas TPU equivalent of F.cross_entropy(preds, targets // 4, ignore_index=-1).

    preds: (N, C) float (bf16/f16/f32 fed in native dtype; cast per-tile in-kernel).
    targets: (N,) int. Returns scalar float32 mean loss (NaN if every row ignored,
    matching torch).
    """
    if isinstance(preds, (list, tuple)):
        preds = jnp.stack([jnp.asarray(p) for p in preds])
    preds = jnp.asarray(preds)
    if not jnp.issubdtype(preds.dtype, jnp.floating):
        preds = preds.astype(jnp.float32)
    if isinstance(targets, (list, tuple)):
        targets = jnp.asarray(targets)
    targets = jnp.asarray(targets, dtype=jnp.int32)

    n, c = preds.shape
    itemsize = preds.dtype.itemsize

    # ---- generation-aware defaults --------------------------------------
    try:
        kind = jax.devices()[0].device_kind.lower()
    except Exception:
        kind = ""
    is_v7 = "v7" in kind
    if num_partials is None:
        num_partials = 2 if is_v7 else 1                  # v5e/v6e are single-TC chips
    if target_tile_bytes is None:
        target_tile_bytes = (2 if is_v7 else 4) * 1024 * 1024
    vmem_cap = (48 if is_v7 else 96) * 1024 * 1024        # headroom below physical VMEM

    # ---- tile geometry (no HBM-side padding; ragged tail handled in-kernel) ----
    sublane_mult = max(8, 32 // itemsize)                 # 8 f32, 16 bf16/f16
    c_lanes = _round_up(c, 128)                           # VMEM lane footprint of a row
    tn = (target_tile_bytes // (c_lanes * itemsize)) // sublane_mult * sublane_mult
    tn = max(sublane_mult, tn)
    tn = min(tn, _round_up(n, sublane_mult))
    if max_block_rows is not None:
        tn = min(tn, max(sublane_mult, _round_up(max_block_rows, sublane_mult)))

    blocks_total = pl.cdiv(n, tn)
    num_partials = max(1, min(num_partials, blocks_total))
    bpp = pl.cdiv(blocks_total, num_partials)             # blocks per partial

    targets_2d = targets.reshape(n, 1)

    # ---- VMEM accounting: 2x input tile + f32 temporaries + targets tiles ----
    tile_in = tn * c_lanes * itemsize
    tile_f32 = tn * c_lanes * 4
    tgt_buf = (tn // 8) * 4096                            # (tn,1) i32 -> tn/8 vregs
    working = 2 * tile_in + 3 * tile_f32 + 2 * tgt_buf + (2 << 20)
    vmem_limit = int(min(vmem_cap, max(16 << 20, working)))

    cost = pl.CostEstimate(
        flops=int(6 * n * c),
        transcendentals=int(n * c + n),
        bytes_accessed=int(n * c * itemsize + n * 4 + num_partials * 8 * 128 * 4),
    )

    kernel = functools.partial(_ce_partial_kernel, n_rows=n)

    def _block_map(p, i):
        # Clamp so a short last partial never requests a fully out-of-bounds block;
        # redundant re-read rows are masked out in-kernel via the row index.
        return (jnp.minimum(p * bpp + i, blocks_total - 1), 0)

    partials = pl.pallas_call(
        kernel,
        out_shape=jax.ShapeDtypeStruct((num_partials, 8, 128), jnp.float32),
        grid=(num_partials, bpp),
        in_specs=[
            pl.BlockSpec((tn, c), _block_map),            # full class axis, no padding
            pl.BlockSpec((tn, 1), _block_map),
        ],
        out_specs=pl.BlockSpec((1, 8, 128), lambda p, i: (p, 0, 0)),
        compiler_params=pltpu.CompilerParams(
            dimension_semantics=("parallel", "arbitrary"),
            vmem_limit_bytes=vmem_limit,
        ),
        cost_estimate=cost,
    )(preds, targets_2d)

    total = jnp.sum(partials[:, 0, 0])
    count = jnp.sum(partials[:, 0, 1])
    return total / count


def _ref_loss(p, t):
    """Plain-JAX reference (same math, no Pallas)."""
    p = p.astype(jnp.float32)
    nt = jnp.floor_divide(t, 4)
    logz = jax.nn.logsumexp(p, axis=-1)
    picked = jnp.take_along_axis(
        p, jnp.clip(nt, 0, p.shape[1] - 1)[:, None], axis=1)[:, 0]
    per = logz - picked
    v = (nt != -1).astype(jnp.float32)
    return jnp.sum(per * v) / jnp.sum(v)


if __name__ == "__main__":
    key = jax.random.PRNGKey(0)
    kp, kt = jax.random.split(key)

    # batch of 8 samples, 32 classes; raw targets in [0, 4*C) so targets//4 in [0, C)
    N, C = 8, 32
    preds = jax.random.normal(kp, (N, C), dtype=jnp.float32)
    targets = jax.random.randint(kt, (N,), 0, 4 * C, dtype=jnp.int32)
    targets = targets.at[2].set(-4)   # (-4 // 4) == -1 -> exercises ignore_index

    loss = custom_cross_entropy_loss(preds, targets)
    jax.block_until_ready(loss)
    ref = _ref_loss(preds, targets)
    assert jnp.allclose(loss, ref, rtol=1e-5, atol=1e-5), (loss, ref)

    # Ragged batch + multi-block / multi-partial path (exercises in-kernel tail mask,
    # clamped index map and the resident accumulator across the inner grid axis).
    N2, C2 = 23, 50
    preds2 = jax.random.normal(kp, (N2, C2), dtype=jnp.float32)
    targets2 = jax.random.randint(kt, (N2,), -4, 4 * C2, dtype=jnp.int32)
    loss2 = custom_cross_entropy_loss(preds2, targets2,
                                      max_block_rows=8, num_partials=2)
    jax.block_until_ready(loss2)
    ref2 = _ref_loss(preds2, targets2)
    assert jnp.allclose(loss2, ref2, rtol=1e-5, atol=1e-5), (loss2, ref2)

    # bf16 path: wrapper keeps bf16 (half the HBM traffic), casts per-tile in-kernel
    loss_bf16 = custom_cross_entropy_loss(preds.astype(jnp.bfloat16), targets)
    jax.block_until_ready(loss_bf16)
    assert jnp.allclose(loss_bf16, ref, rtol=5e-2, atol=5e-2), (loss_bf16, ref)

    print("KERNEL_OK")
</pallas_src>

<mosaic_0001>
module attributes {stable_mosaic.version = 11 : i64} {
  func.func @_ce_partial_kernel(%arg0: i32, %arg1: i32, %arg2: memref<8x32xf32, #tpu.memory_space<vmem>>, %arg3: memref<8x1xi32, #tpu.memory_space<vmem>>, %arg4: memref<1x8x128xf32, #tpu.memory_space<vmem>>) attributes {dimension_semantics = [#tpu.dimension_semantics<parallel>, #tpu.dimension_semantics<arbitrary>], iteration_bounds = array<i64: 1, 1>, scalar_prefetch = 0 : i64, scratch_operands = 0 : i64, tpu.core_type = #tpu.core_type<tc>, window_params = [{transform_indices = @transform_0, window_bounds = array<i64: 8, 32>}, {transform_indices = @transform_1, window_bounds = array<i64: 8, 1>}, {transform_indices = @transform_2, window_bounds = array<i64: 1, 8, 128>}]} {
    %c0_i32 = arith.constant 0 : i32
    %0 = arith.cmpi eq, %arg1, %c0_i32 : i32
    %1 = arith.extui %0 : i1 to i32
    %c0_i32_0 = arith.constant 0 : i32
    %2 = arith.cmpi ne, %1, %c0_i32_0 : i32
    scf.if %2 {
      %cst_23 = arith.constant 0.000000e+00 : f32
      %68 = vector.broadcast %cst_23 : f32 to vector<1x8x128xf32>
      %c0_24 = arith.constant 0 : index
      %c0_25 = arith.constant 0 : index
      %c0_26 = arith.constant 0 : index
      %69 = vector.load %arg4[%c0_24, %c0_25, %c0_26] : memref<1x8x128xf32, #tpu.memory_space<vmem>>, vector<1x8x128xf32>
      tpu.vector_store %arg4[%c0_24, %c0_25, %c0_26], %68 {strides = array<i32>} : memref<1x8x128xf32, #tpu.memory_space<vmem>>, vector<1x8x128xf32>,
    } else {
    }
    %c0 = arith.constant 0 : index
    %c0_1 = arith.constant 0 : index
    %3 = vector.load %arg2[%c0, %c0_1] : memref<8x32xf32, #tpu.memory_space<vmem>>, vector<8x32xf32>
    %c0_2 = arith.constant 0 : index
    %c0_3 = arith.constant 0 : index
    %4 = vector.load %arg3[%c0_2, %c0_3] : memref<8x1xi32, #tpu.memory_space<vmem>>, vector<8x1xi32>
    %c2_i32 = arith.constant 2 : i32
    %5 = vector.broadcast %c2_i32 : i32 to vector<8x1xi32>
    %6 = arith.shrsi %4, %5 : vector<8x1xi32>
    %cst = arith.constant dense<0xFF800000> : vector<8xf32>
    %7 = vector.multi_reduction <maximumf>, %3, %cst [1] : vector<8x32xf32> to vector<8xf32>
    %8 = vector.shape_cast %7 : vector<8xf32> to vector<8x1xf32>
    %9 = vector.broadcast %8 : vector<8x1xf32> to vector<8x32xf32>
    %10 = arith.subf %3, %9 : vector<8x32xf32>
    %11 = math.exp %10 : vector<8x32xf32>
    %cst_4 = arith.constant dense<0.000000e+00> : vector<8xf32>
    %12 = vector.multi_reduction <add>, %11, %cst_4 [1] : vector<8x32xf32> to vector<8xf32>
    %13 = vector.shape_cast %12 : vector<8xf32> to vector<8x1xf32>
    %14 = tpu.iota {dimensions = array<i32: 1>} : vector<8x32xi32>
    %15 = vector.broadcast %6 : vector<8x1xi32> to vector<8x32xi32>
    %16 = arith.cmpi eq, %14, %15 : vector<8x32xi32>
    %cst_5 = arith.constant 0.000000e+00 : f32
    %17 = vector.broadcast %cst_5 : f32 to vector<8x32xf32>
    %18 = arith.select %16, %10, %17 : vector<8x32xi1>, vector<8x32xf32>
    %cst_6 = arith.constant dense<0.000000e+00> : vector<8xf32>
    %19 = vector.multi_reduction <add>, %18, %cst_6 [1] : vector<8x32xf32> to vector<8xf32>
    %20 = vector.shape_cast %19 : vector<8xf32> to vector<8x1xf32>
    %21 = math.log %13 : vector<8x1xf32>
    %22 = arith.subf %21, %20 : vector<8x1xf32>
    %c1_i32 = arith.constant 1 : i32
    %23 = arith.muli %arg0, %c1_i32 : i32
    %24 = arith.addi %23, %arg1 : i32
    %c8_i32 = arith.constant 8 : i32
    %25 = arith.muli %24, %c8_i32 : i32
    %26 = tpu.iota {dimensions = array<i32: 0>} : vector<8x1xi32>
    %27 = vector.broadcast %25 : i32 to vector<8x1xi32>
    %28 = arith.addi %27, %26 : vector<8x1xi32>
    %c-1_i32 = arith.constant -1 : i32
    %29 = vector.broadcast %c-1_i32 : i32 to vector<8x1xi32>
    %30 = arith.cmpi ne, %6, %29 : vector<8x1xi32>
    %c8_i32_7 = arith.constant 8 : i32
    %31 = vector.broadcast %c8_i32_7 : i32 to vector<8x1xi32>
    %32 = arith.cmpi slt, %28, %31 : vector<8x1xi32>
    %33 = arith.andi %30, %32 : vector<8x1xi1>
    %cst_8 = arith.constant 0.000000e+00 : f32
    %34 = vector.broadcast %cst_8 : f32 to vector<8x1xf32>
    %35 = arith.select %33, %22, %34 : vector<8x1xi1>, vector<8x1xf32>
    %36 = vector.shape_cast %35 : vector<8x1xf32> to vector<1x8x1xf32>
    %cst_9 = arith.constant dense<0.000000e+00> : vector<1xf32>
    %37 = vector.multi_reduction <add>, %36, %cst_9 [1, 2] : vector<1x8x1xf32> to vector<1xf32>
    %38 = vector.shape_cast %37 : vector<1xf32> to vector<1x1x1xf32>
    %39 = vector.extract %38[0, 0, 0] : f32 from vector<1x1x1xf32>
    %40 = arith.extui %33 : vector<8x1xi1> to vector<8x1xi32>
    %41 = arith.sitofp %40 : vector<8x1xi32> to vector<8x1xf32>
    %42 = vector.shape_cast %41 : vector<8x1xf32> to vector<1x8x1xf32>
    %cst_10 = arith.constant dense<0.000000e+00> : vector<1xf32>
    %43 = vector.multi_reduction <add>, %42, %cst_10 [1, 2] : vector<1x8x1xf32> to vector<1xf32>
    %44 = vector.shape_cast %43 : vector<1xf32> to vector<1x1x1xf32>
    %45 = vector.extract %44[0, 0, 0] : f32 from vector<1x1x1xf32>
    %46 = tpu.iota {dimensions = array<i32: 1>} : vector<1x8x128xi32>
    %47 = tpu.iota {dimensions = array<i32: 2>} : vector<1x8x128xi32>
    %c0_i32_11 = arith.constant 0 : i32
    %48 = vector.broadcast %c0_i32_11 : i32 to vector<1x8x128xi32>
    %49 = arith.cmpi eq, %46, %48 : vector<1x8x128xi32>
    %c0_i32_12 = arith.constant 0 : i32
    %50 = vector.broadcast %c0_i32_12 : i32 to vector<1x8x128xi32>
    %51 = arith.cmpi eq, %47, %50 : vector<1x8x128xi32>
    %52 = arith.andi %49, %51 : vector<1x8x128xi1>
    %cst_13 = arith.constant 0.000000e+00 : f32
    %53 = vector.broadcast %39 : f32 to vector<1x8x128xf32>
    %54 = vector.broadcast %cst_13 : f32 to vector<1x8x128xf32>
    %55 = arith.select %52, %53, %54 : vector<1x8x128xi1>, vector<1x8x128xf32>
    %c0_i32_14 = arith.constant 0 : i32
    %56 = vector.broadcast %c0_i32_14 : i32 to vector<1x8x128xi32>
    %57 = arith.cmpi eq, %46, %56 : vector<1x8x128xi32>
    %c1_i32_15 = arith.constant 1 : i32
    %58 = vector.broadcast %c1_i32_15 : i32 to vector<1x8x128xi32>
    %59 = arith.cmpi eq, %47, %58 : vector<1x8x128xi32>
    %60 = arith.andi %57, %59 : vector<1x8x128xi1>
    %cst_16 = arith.constant 0.000000e+00 : f32
    %61 = vector.broadcast %45 : f32 to vector<1x8x128xf32>
    %62 = vector.broadcast %cst_16 : f32 to vector<1x8x128xf32>
    %63 = arith.select %60, %61, %62 : vector<1x8x128xi1>, vector<1x8x128xf32>
    %64 = arith.addf %55, %63 : vector<1x8x128xf32>
    %c0_17 = arith.constant 0 : index
    %c0_18 = arith.constant 0 : index
    %c0_19 = arith.constant 0 : index
    %65 = vector.load %arg4[%c0_17, %c0_18, %c0_19] : memref<1x8x128xf32, #tpu.memory_space<vmem>>, vector<1x8x128xf32>
    %66 = arith.addf %65, %64 : vector<1x8x128xf32>
    %c0_20 = arith.constant 0 : index
    %c0_21 = arith.constant 0 : index
    %c0_22 = arith.constant 0 : index
    %67 = vector.load %arg4[%c0_20, %c0_21, %c0_22] : memref<1x8x128xf32, #tpu.memory_space<vmem>>, vector<1x8x128xf32>
    tpu.vector_store %arg4[%c0_20, %c0_21, %c0_22], %66 {strides = array<i32>} : memref<1x8x128xf32, #tpu.memory_space<vmem>>, vector<1x8x128xf32>,
    return
  }
  func.func @transform_0(%arg0: i32, %arg1: i32) -> (i32, i32) {
    %c1_i32 = arith.constant 1 : i32
    %0 = arith.muli %arg0, %c1_i32 : i32
    %1 = arith.addi %0, %arg1 : i32
    %c0_i32 = arith.constant 0 : i32
    %2 = arith.minsi %1, %c0_i32 : i32
    %c0_i32_0 = arith.constant 0 : i32
    %c0_i32_1 = arith.constant 0 : i32
    return %2, %c0_i32_0 : i32, i32
  }
  func.func @transform_1(%arg0: i32, %arg1: i32) -> (i32, i32) {
    %c1_i32 = arith.constant 1 : i32
    %0 = arith.muli %arg0, %c1_i32 : i32
    %1 = arith.addi %0, %arg1 : i32
    %c0_i32 = arith.constant 0 : i32
    %2 = arith.minsi %1, %c0_i32 : i32
    %c0_i32_0 = arith.constant 0 : i32
    %c0_i32_1 = arith.constant 0 : i32
    return %2, %c0_i32_0 : i32, i32
  }
  func.func @transform_2(%arg0: i32, %arg1: i32) -> (i32, i32, i32) {
    %c0_i32 = arith.constant 0 : i32
    %c0_i32_0 = arith.constant 0 : i32
    %c0_i32_1 = arith.constant 0 : i32
    return %arg0, %c0_i32, %c0_i32_0 : i32, i32, i32
  }
}

</mosaic_0001>

<llo_original>
// kernel: tpu_custom_call.1
$region0: #{tpu_custom_call.1}
  #allocation0 [shape = 'u32[]', space=smem, size = 0x4, offset = 0x4, fixed_abs, tag = 'smem constant byte address 0x4 - core index']
  #allocation1 [shape = 'u32[144,128]{1,0:T(1,128)}', space=vmem, size = 0x12000, scoped, tag = 'internal scratch']
  %s0 = inlined_call_operand.vmem [shape: f32[8,32], index: 0, kind: input, shape index: {}]
  %s1 = inlined_call_operand.vmem [shape: s32[8,1], index: 1, kind: input, shape index: {}]
  %s2 = inlined_call_operand.hbm [shape: f32[1,8,128], index: 2, kind: output, shape index: {}]
  %s3 = sld [smem:[#allocation0]]
  $region22: #{tpu_custom_call.1} parent=0
    _
  %s5 = ssub.s32 1, %s3
  %s6 = scalar_select 0, %s5, %s3
  $region1: #{tpu_custom_call.1} parent=0
    #allocation2 [shape = 'u8[4096]{0}', space=vmem, size = 0x1000, scoped, tag = 'output window, operand 0, single buffered']
    #allocation3 [shape = 's32[1]{0}', space=sflag, size = 0x4, scoped, tag = 'scoped memory for tpu_custom_call.1']
    %7 = vsyncpa [#allocation3], 0
    // Predicated region
    $region2: #{tpu_custom_call.1} parent=1 // pred_check
      _
    $region3: #{tpu_custom_call.1} parent=1 // pred_check_branch
      %9 = sbr.rel (0) target = $region5
    $region4: #{tpu_custom_call.1} parent=1 // pred_region
      %s10 = sadd.s32 0, 0
      %p11 = scmp.lt.s32.totalorder %s10, 0
      %s12 = scalar_select %p11, %s10, 0
      %p13 = scmp.lt.s32.totalorder %s12, 0
      %s14 = scalar_select %p13, %s12, 0
      %s15 = smul.addr %s14, 8
      %s16 = scalar_lea.vmem %s0, %s15
      %s17 = sadd.s32 0, 0
      %p18 = scmp.lt.s32.totalorder %s17, 0
      %s19 = scalar_select %p18, %s17, 0
    $region5: #{tpu_custom_call.1} parent=1 // pred_fallthru
      _
    // Predicated region
    $region6: #{tpu_custom_call.1} parent=1 // pred_check
      _
    $region7: #{tpu_custom_call.1} parent=1 // pred_check_branch
      %21 = sbr.rel (0) target = $region9
    $region8: #{tpu_custom_call.1} parent=1 // pred_region
      %s22 = sadd.s32 0, 0
      %p23 = scmp.lt.s32.totalorder %s22, 0
      %s24 = scalar_select %p23, %s22, 0
      %p25 = scmp.lt.s32.totalorder %s24, 0
      %s26 = scalar_select %p25, %s24, 0
      %s27 = smul.addr %s26, 8
      %s28 = scalar_lea.vmem %s1, %s27
      %s29 = sadd.s32 0, 0
      %p30 = scmp.lt.s32.totalorder %s29, 0
      %s31 = scalar_select %p30, %s29, 0
    $region9: #{tpu_custom_call.1} parent=1 // pred_fallthru
      _
    %s32 = sadd.s32 0, 0
    %p33 = scmp.lt.s32.totalorder %s32, 0
    %s34 = scalar_select %p33, %s32, 0
    %p35 = scmp.lt.s32.totalorder %s34, 0
    %s36 = scalar_select %p35, %s34, 0
    %s37 = smul.addr %s36, 8
    %s38 = scalar_lea.vmem %s0, %s37
    %s39 = sadd.s32 0, 0
    %p40 = scmp.lt.s32.totalorder %s39, 0
    %s41 = scalar_select %p40, %s39, 0
    %p42 = scmp.lt.s32.totalorder %s41, 0
    %s43 = scalar_select %p42, %s41, 0
    %s44 = smul.addr %s43, 8
    %s45 = scalar_lea.vmem %s1, %s44
    %s46 = sadd.s32 0, 0
    %p47 = scmp.lt.s32.totalorder %s46, 0
    %s48 = scalar_select %p47, %s46, 0
    %p49 = scmp.lt.s32.totalorder %s48, 0
    %s50 = scalar_select %p49, %s48, 0
    %s51 = smul.addr %s50, 8
    %s52 = scalar_lea.vmem %s0, %s51
    %s53 = sadd.s32 0, 0
    %p54 = scmp.lt.s32.totalorder %s53, 0
    %s55 = scalar_select %p54, %s53, 0
    %s56 = sadd.s32 0, 0
    %p57 = scmp.lt.s32.totalorder %s56, 0
    %s58 = scalar_select %p57, %s56, 0
    %p59 = scmp.lt.s32.totalorder %s58, 0
    %s60 = scalar_select %p59, %s58, 0
    %s61 = smul.addr %s60, 8
    %s62 = scalar_lea.vmem %s1, %s61
    %s63 = sadd.s32 0, 0
    %p64 = scmp.lt.s32.totalorder %s63, 0
    %s65 = scalar_select %p64, %s63, 0
    %p66 = scmp.eq.s32.totalorder 0, 0
    // Predicated region
    $region10: #{tpu_custom_call.1} parent=1 // pred_check
      %p67 = pneg %p66
    $region11: #{tpu_custom_call.1} parent=1 // pred_check_branch
      %69 = sbr.rel (%p67) target = $region13
    $region12: #{tpu_custom_call.1} parent=1 // pred_region
      %70 = vst [vmem:[#allocation2] sm:$0xff] 0.0
    $region13: #{tpu_custom_call.1} parent=1 // pred_fallthru
      _
    %v71 = vld [vmem:[%s52] sm:$0xff]
    %v72 = vld [vmem:[%s62] sm:$0xff]
    %v73 = vshra.s32 %v72, 2
    %vm74 = vcmask 261120
    %v75 = vsel %vm74, %v71, -inf
    %76 = vmax.xlane.f32.xlu0 %v75
    %v77 = vpop.xlane.xlu0 %76
    %v78 = vsub.f32 %v71, %v77
    %v79 = vmul.f32 %v78, 1.442695
    %v80 = vpow.pop %v79
    %v81 = vsel %vm74, %v80, 0.0
    %82 = vadd.xlane.f32.xlu0 %v81
    %v83 = vpop.xlane.xlu0 %82
    %v84 = vlaneseq
    %v85 = vand.u32 %v84, 127
    %86 = vset.pattern.permute.xlu0 0
    %87 = vperm.xlu0 %86, %v73
    %v88 = vpop.permute.xlu0 %87
    %vm89 = vcmp.eq.s32.totalorder %v85, %v88
    %v90 = vsel %vm89, %v78, 0.0
    %v91 = vsel %vm74, %v90, 0.0
    %92 = vadd.xlane.f32.xlu0 %v91
    %v93 = vpop.xlane.xlu0 %92
    %v94 = vlog2.pop %v83
    %v95 = vmul.f32 %v94, 0.6931472
    %v96 = vsub.f32 %v95, %v93
    %s97 = sadd.s32 0, 0
    %s98 = smul.u32 %s97, 8
    %v99 = vlaneseq
    %v100 = vshrl.u32 %v99, 7
    %v101 = vstv %s98
    %v102 = vadd.s32 %v101, %v100
    %vm103 = vcmp.ne.s32.totalorder %v73, 4294967295
    %vm104 = vcmp.lt.s32.totalorder %v102, 8
    %vm105 = vmand %vm103, %vm104
    %v106 = vsel %vm105, %v96, 0.0
    %vm107 = vcmask 7168
    %v108 = vsel %vm107, %v106, 0.0
    %109 = vadd.xlane.f32.xlu0 %v108
    %v110 = vpop.xlane.xlu0 %109
    %v111 = vrot.slane %v110, 4
    %v112 = vadd.f32 %v110, %v111
    %v113 = vrot.slane %v112, 2
    %v114 = vadd.f32 %v112, %v113
    %v115 = vrot.slane %v114, 1
    %v116 = vadd.f32 %v114, %v115
    %s117 = vtos %v116
    %v118 = vsel %vm105, 1, 0
    %v119 = vcvt.s32.f32 %v118
    %v120 = vsel %vm107, %v119, 0.0
    %121 = vadd.xlane.f32.xlu0 %v120
    %v122 = vpop.xlane.xlu0 %121
    %v123 = vrot.slane %v122, 4
    %v124 = vadd.f32 %v122, %v123
    %v125 = vrot.slane %v124, 2
    %v126 = vadd.f32 %v124, %v125
    %v127 = vrot.slane %v126, 1
    %v128 = vadd.f32 %v126, %v127
    %s129 = vtos %v128
    %vm130 = vcmp.eq.s32.totalorder %v100, 0
    %vm131 = vcmp.eq.s32.totalorder %v85, 0
    %vm132 = vmand %vm130, %vm131
    %v133 = vstv %s117
    %v134 = vsel %vm132, %v133, 0.0
    %vm135 = vcmp.eq.s32.totalorder %v85, 1
    %vm136 = vmand %vm130, %vm135
    %v137 = vstv %s129
    %v138 = vsel %vm136, %v137, 0.0
    %v139 = vadd.f32 %v134, %v138
    %v140 = vld [vmem:[#allocation2] sm:$0xff]
    %v141 = vadd.f32 %v140, %v139
    %142 = vst [vmem:[#allocation2] sm:$0xff] %v141
    // Predicated region
    $region14: #{tpu_custom_call.1} parent=1 // pred_check
      _
    $region15: #{tpu_custom_call.1} parent=1 // pred_check_branch
      %144 = sbr.rel (0) target = $region17
    $region16: #{tpu_custom_call.1} parent=1 // pred_region
      %s146 = ssub.s32 128, 128
      %147 = vsyncadd [#allocation3], %s146
      %s149 = sshll.u32 [#allocation2], 4
      %s150 = int_to_ptr.vmem [resolvable:$true] %s149
      %152 = dma.vmem_to_hbm [thread:$0]  %s150, 128, %s2, [#allocation3]
    $region17: #{tpu_custom_call.1} parent=1 // pred_fallthru
      _
    // Predicated region
    $region18: #{tpu_custom_call.1} parent=1 // pred_check
      _
    $region19: #{tpu_custom_call.1} parent=1 // pred_check_branch
      %154 = sbr.rel (0) target = $region21
    $region20: #{tpu_custom_call.1} parent=1 // pred_region
      %155 = dma.done [#allocation3], 128
    $region21: #{tpu_custom_call.1} parent=1 // pred_fallthru
      _
    %156 = vsyncpa [#allocation3], 1

</llo_original>
